<compile_context>
chip_gen: v7x
topology: tpu7x:2x2x1
jax: 0.10.0
libtpu: 0.0.40
codegen_flags: <defaults>
</compile_context>

<pallas_src>
import functools
import math

import jax
import jax.numpy as jnp
from jax.experimental import pallas as pl
from jax.experimental.pallas import tpu as pltpu


def _round_up(x, m):
    return ((x + m - 1) // m) * m


def nais_attn_kernel(p_ref, q_ref, m_ref, tile_ref, wbd_ref, b_ref, hsel_ref,
                     ones_ref, out_ref, *, beta):
    # p_ref   : (tb, D)       embed dtype (bf16/f32), target item embedding
    # q_ref   : (tb, H*D)     embed dtype, lane-dense flattened history
    # m_ref   : (tb, H)       f32, 1.0 == masked (target item & padding)
    # tile_ref: (D, H*D)      f32, kron(ones(1,H), eye(D))  -> tile p across H
    # wbd_ref : (H*D, H*D)    f32, kron(eye(H), W)          -> block-diag MLP W
    # b_ref   : (1, H*D)      f32, bias tiled across H
    # hsel_ref: (H*D, H)      f32, kron(eye(H), h[:,None])  -> e reduction
    # ones_ref: (H*D, H)      f32, kron(eye(H), ones(D,1))  -> <q_j,p> reduction
    # out_ref : (tb, 1)       f32 logits
    p = p_ref[...].astype(jnp.float32)                          # (tb, D)
    q = q_ref[...].astype(jnp.float32)                          # (tb, H*D)
    m = m_ref[...]                                              # (tb, H)

    # Tile p across the H history slots on the (idle) MXU -> lane-dense.
    p_tiled = jnp.dot(p, tile_ref[...],
                      preferred_element_type=jnp.float32)       # (tb, H*D)
    pq = q * p_tiled                                            # (tb, H*D)

    # Attention MLP: one lane-dense MXU matmul against block-diagonal W.
    hidden = jnp.dot(pq, wbd_ref[...],
                     preferred_element_type=jnp.float32)        # (tb, H*D)
    hidden = jnp.maximum(hidden + b_ref[...], 0.0)              # (tb, H*D)

    # axis=-1 reductions as selector matmuls (MXU) instead of XLU reduces.
    e = jnp.dot(hidden, hsel_ref[...],
                preferred_element_type=jnp.float32)             # (tb, H)
    pq_dot = jnp.dot(pq, ones_ref[...],
                     preferred_element_type=jnp.float32)        # (tb, H)

    # beta-smoothed masked softmax, fused into the final logit:
    #   logit_i = (sum_j exp(e_ij) <q_j, p_i>) / (sum_j exp(e_ij))^beta
    # NOTE: like the PyTorch reference there is no max-subtraction (it is not
    # shift-invariant for beta != 1), and an all-masked row yields NaN (0/0),
    # also matching the reference.
    exp_e = jnp.where(m > 0.5, 0.0, jnp.exp(e))                 # (tb, H)
    s = jnp.sum(exp_e, axis=-1, keepdims=True)                  # (tb, 1)
    num = jnp.sum(exp_e * pq_dot, axis=-1, keepdims=True)       # (tb, 1)
    if beta == 0.5:
        inv = jax.lax.rsqrt(s)                                  # EUP rsqrt
    elif beta == 1.0:
        inv = 1.0 / s
    elif beta == 0.0:
        inv = jnp.ones_like(s)
    else:
        inv = jnp.exp(-beta * jnp.log(s))
    out_ref[...] = num * inv                                    # (tb, 1)


def _choose_tb(B, HD, D, H, in_itemsize):
    # Lane-dense VMEM bytes per batch row at a given tile:
    #   2x (double-buffered) input blocks (q + p + mask) in the embed dtype
    #   + ~3 f32 (H*D)-wide intermediates Mosaic materializes (pq, hidden, relu)
    per_row = 2 * in_itemsize * (HD + D + H) + 3 * 4 * HD
    budget = 12 * 2**20        # well under the 32 MiB scoped default (v7x: 64 MiB phys)
    cap = max(8, (budget // per_row) // 8 * 8)
    tb = min(cap, 256)         # modest tiles -> >= 2 grid steps for v7x's 2 TCs
    if B <= tb:
        # split small batches into (at least) two tiles so both cores get work
        tb = max(8, _round_up((B + 1) // 2, 8))
    return tb


def nais_score_pallas(p, q, mask_f, W, b, h, *, beta, tb=None):
    B, H, D = q.shape
    assert p.shape == (B, D) and mask_f.shape == (B, H)
    assert p.dtype == q.dtype
    in_dtype = p.dtype
    mask_f = mask_f.astype(jnp.float32)

    # Pad H so the flattened history axis H*D is a multiple of 128 lanes
    # (padded slots are fully masked -> contribute exactly zero).
    lane_mult = 128 // math.gcd(D, 128)
    H_pad = _round_up(H, lane_mult)
    if H_pad != H:
        q = jnp.pad(q, ((0, 0), (0, H_pad - H), (0, 0)))
        mask_f = jnp.pad(mask_f, ((0, 0), (0, H_pad - H)), constant_values=1.0)
    HD = H_pad * D

    if tb is None:
        tb = _choose_tb(B, HD, D, H_pad, jnp.dtype(in_dtype).itemsize)
    assert tb % 8 == 0

    B_pad = _round_up(B, tb)
    if B_pad != B:
        pad = B_pad - B
        # zero, unmasked rows -> finite math, logit exactly 0 (sliced off below)
        p = jnp.pad(p, ((0, pad), (0, 0)))
        q = jnp.pad(q, ((0, pad), (0, 0), (0, 0)))
        mask_f = jnp.pad(mask_f, ((0, pad), (0, 0)))

    q_flat = q.reshape(B_pad, HD)                     # lane-dense history (free reshape)

    # Constant (grid-resident) operands, built once per call in f32.
    W32 = W.astype(jnp.float32)
    b32 = b.reshape(-1).astype(jnp.float32)
    h32 = h.reshape(-1).astype(jnp.float32)
    eyeH = jnp.eye(H_pad, dtype=jnp.float32)
    W_bd = jnp.kron(eyeH, W32)                                        # (HD, HD)
    b_flat = jnp.tile(b32.reshape(1, D), (1, H_pad))                  # (1, HD)
    h_sel = jnp.kron(eyeH, h32.reshape(D, 1))                         # (HD, H_pad)
    ones_sel = jnp.kron(eyeH, jnp.ones((D, 1), jnp.float32))          # (HD, H_pad)
    tile_sel = jnp.kron(jnp.ones((1, H_pad), jnp.float32),
                        jnp.eye(D, dtype=jnp.float32))                # (D, HD)

    kernel = functools.partial(nais_attn_kernel, beta=beta)
    out = pl.pallas_call(
        kernel,
        out_shape=jax.ShapeDtypeStruct((B_pad, 1), jnp.float32),
        grid_spec=pltpu.PrefetchScalarGridSpec(
            num_scalar_prefetch=0,
            grid=(B_pad // tb,),
            in_specs=[
                pl.BlockSpec((tb, D), lambda i: (i, 0)),         # p
                pl.BlockSpec((tb, HD), lambda i: (i, 0)),        # q (lane-dense)
                pl.BlockSpec((tb, H_pad), lambda i: (i, 0)),     # mask
                # constant block index -> DMA'd once, stay VMEM-resident
                pl.BlockSpec((D, HD), lambda i: (0, 0)),         # tile_sel
                pl.BlockSpec((HD, HD), lambda i: (0, 0)),        # W_bd
                pl.BlockSpec((1, HD), lambda i: (0, 0)),         # b
                pl.BlockSpec((HD, H_pad), lambda i: (0, 0)),     # h_sel
                pl.BlockSpec((HD, H_pad), lambda i: (0, 0)),     # ones_sel
            ],
            out_specs=pl.BlockSpec((tb, 1), lambda i: (i, 0)),   # sublane-major logits
        ),
        compiler_params=pltpu.CompilerParams(
            dimension_semantics=("parallel",),   # batch tiles shard across TCs
            vmem_limit_bytes=32 * 1024 * 1024,
        ),
    )(p, q_flat, mask_f, tile_sel, W_bd, b_flat, h_sel, ones_sel)
    return out[:B, 0]


def nais_forward(params, user_idx, item_idx, *, beta, n_items,
                 embed_dtype=jnp.bfloat16):
    """Equivalent of Module.forward(user_idx, item_idx) -> logit (B,)."""
    hist = params["trn_pos_per_user"][user_idx]                     # (B, H)
    mask = (hist == item_idx[:, None]) | (hist == n_items)          # (B, H) bool
    # bf16 storage for the dominant HBM streams; math stays f32 in the kernel.
    p = params["embed_target"][item_idx].astype(embed_dtype)        # (B, D)
    q = params["embed_hist"][hist].astype(embed_dtype)              # (B, H, D)
    return nais_score_pallas(p, q, mask.astype(jnp.float32),
                             params["W"], params["b"], params["h"], beta=beta)


def nais_forward_ref(params, user_idx, item_idx, *, beta, n_items,
                     embed_dtype=jnp.bfloat16):
    """Pure-JAX reference (same embedding quantization as the kernel path)."""
    hist = params["trn_pos_per_user"][user_idx]
    mask = (hist == item_idx[:, None]) | (hist == n_items)
    p = params["embed_target"][item_idx].astype(embed_dtype).astype(jnp.float32)
    q = params["embed_hist"][hist].astype(embed_dtype).astype(jnp.float32)
    pq = q * p[:, None, :]
    hidden = jax.nn.relu(jnp.einsum("bhd,de->bhe", pq, params["W"]) + params["b"])
    e = jnp.sum(hidden * params["h"], axis=-1)
    exp_e = jnp.where(mask, 0.0, jnp.exp(e))
    denom = jnp.sum(exp_e, axis=1, keepdims=True) ** beta
    alpha = exp_e / denom
    context = jnp.sum(alpha[:, :, None] * q, axis=1)
    return jnp.sum(context * p, axis=1)


if __name__ == "__main__":
    # small, deterministic shapes consistent with the module
    n_users, n_items, n_factors = 16, 50, 32     # D = 32
    hist_len, batch = 8, 16                      # H = 8, B = 16
    beta = 0.5

    key = jax.random.PRNGKey(0)
    k1, k2, k3, k4, k5, k6, k7, k8 = jax.random.split(key, 8)

    # trn_pos_per_user: (n_users, H), values in [0, n_items]; n_items == padding idx
    trn_pos_per_user = jax.random.randint(k1, (n_users, hist_len), 0, n_items + 1,
                                          dtype=jnp.int32)

    # embeddings: (n_items + 1, D) with padding row (index n_items) zeroed
    embed_target = 0.1 * jax.random.normal(k2, (n_items + 1, n_factors), jnp.float32)
    embed_hist = 0.1 * jax.random.normal(k3, (n_items + 1, n_factors), jnp.float32)
    embed_target = embed_target.at[n_items].set(0.0)
    embed_hist = embed_hist.at[n_items].set(0.0)

    params = {
        "trn_pos_per_user": trn_pos_per_user,
        "embed_target": embed_target,
        "embed_hist": embed_hist,
        "W": 0.1 * jax.random.normal(k4, (n_factors, n_factors), jnp.float32),
        "b": 0.1 * jax.random.normal(k5, (n_factors,), jnp.float32),
        "h": 0.1 * jax.random.normal(k6, (n_factors,), jnp.float32),
    }

    user_idx = jax.random.randint(k7, (batch,), 0, n_users, dtype=jnp.int32)
    item_idx = jax.random.randint(k8, (batch,), 0, n_items, dtype=jnp.int32)

    logit = nais_forward(params, user_idx, item_idx, beta=beta, n_items=n_items)
    logit = jax.block_until_ready(logit)

    ref = nais_forward_ref(params, user_idx, item_idx, beta=beta, n_items=n_items)
    assert logit.shape == (batch,)
    # bf16 embedding storage + MXU accumulation order -> tolerance loosened vs 1e-5
    assert jnp.allclose(logit, ref, atol=2e-3, rtol=2e-2), (logit, ref)

    print("KERNEL_OK")
</pallas_src>

<mosaic_0001>
module attributes {stable_mosaic.version = 11 : i64} {
  func.func @nais_attn_kernel(%arg0: i32, %arg1: memref<8x32xbf16, #tpu.memory_space<vmem>>, %arg2: memref<8x256xbf16, #tpu.memory_space<vmem>>, %arg3: memref<8x8xf32, #tpu.memory_space<vmem>>, %arg4: memref<32x256xf32, #tpu.memory_space<vmem>>, %arg5: memref<256x256xf32, #tpu.memory_space<vmem>>, %arg6: memref<1x256xf32, #tpu.memory_space<vmem>>, %arg7: memref<256x8xf32, #tpu.memory_space<vmem>>, %arg8: memref<256x8xf32, #tpu.memory_space<vmem>>, %arg9: memref<8x1xf32, #tpu.memory_space<vmem>>) attributes {dimension_semantics = [#tpu.dimension_semantics<parallel>], iteration_bounds = array<i64: 2>, scalar_prefetch = 0 : i64, scratch_operands = 0 : i64, tpu.core_type = #tpu.core_type<tc>, window_params = [{transform_indices = @transform_0, window_bounds = array<i64: 8, 32>}, {transform_indices = @transform_1, window_bounds = array<i64: 8, 256>}, {transform_indices = @transform_2, window_bounds = array<i64: 8, 8>}, {pipeline_mode = #tpu.pipeline_mode<synchronous>, transform_indices = @transform_3, window_bounds = array<i64: 32, 256>}, {pipeline_mode = #tpu.pipeline_mode<synchronous>, transform_indices = @transform_4, window_bounds = array<i64: 256, 256>}, {pipeline_mode = #tpu.pipeline_mode<synchronous>, transform_indices = @transform_5, window_bounds = array<i64: 1, 256>}, {pipeline_mode = #tpu.pipeline_mode<synchronous>, transform_indices = @transform_6, window_bounds = array<i64: 256, 8>}, {pipeline_mode = #tpu.pipeline_mode<synchronous>, transform_indices = @transform_7, window_bounds = array<i64: 256, 8>}, {transform_indices = @transform_8, window_bounds = array<i64: 8, 1>}]} {
    %c0 = arith.constant 0 : index
    %c0_0 = arith.constant 0 : index
    %0 = vector.load %arg1[%c0, %c0_0] : memref<8x32xbf16, #tpu.memory_space<vmem>>, vector<8x32xbf16>
    %1 = arith.extf %0 : vector<8x32xbf16> to vector<8x32xf32>
    %c0_1 = arith.constant 0 : index
    %c0_2 = arith.constant 0 : index
    %2 = vector.load %arg2[%c0_1, %c0_2] : memref<8x256xbf16, #tpu.memory_space<vmem>>, vector<8x256xbf16>
    %3 = arith.extf %2 : vector<8x256xbf16> to vector<8x256xf32>
    %c0_3 = arith.constant 0 : index
    %c0_4 = arith.constant 0 : index
    %4 = vector.load %arg3[%c0_3, %c0_4] : memref<8x8xf32, #tpu.memory_space<vmem>>, vector<8x8xf32>
    %c0_5 = arith.constant 0 : index
    %c0_6 = arith.constant 0 : index
    %5 = vector.load %arg4[%c0_5, %c0_6] : memref<32x256xf32, #tpu.memory_space<vmem>>, vector<32x256xf32>
    %cst = arith.constant dense<0.000000e+00> : vector<8x256xf32>
    %6 = tpu.matmul %1, %5, %cst {dimension_numbers = #tpu.dot_dimension_numbers<[1], [0], [0], [1], [0, 0, 1, 1], [], []>} : vector<8x32xf32>, vector<32x256xf32>, vector<8x256xf32> -> vector<8x256xf32>
    %7 = arith.mulf %3, %6 : vector<8x256xf32>
    %c0_7 = arith.constant 0 : index
    %c0_8 = arith.constant 0 : index
    %8 = vector.load %arg5[%c0_7, %c0_8] : memref<256x256xf32, #tpu.memory_space<vmem>>, vector<256x256xf32>
    %cst_9 = arith.constant dense<0.000000e+00> : vector<8x256xf32>
    %9 = tpu.matmul %7, %8, %cst_9 {dimension_numbers = #tpu.dot_dimension_numbers<[1], [0], [0], [1], [0, 0, 1, 1], [], []>} : vector<8x256xf32>, vector<256x256xf32>, vector<8x256xf32> -> vector<8x256xf32>
    %c0_10 = arith.constant 0 : index
    %c0_11 = arith.constant 0 : index
    %10 = vector.load %arg6[%c0_10, %c0_11] : memref<1x256xf32, #tpu.memory_space<vmem>>, vector<1x256xf32>
    %11 = vector.broadcast %10 : vector<1x256xf32> to vector<8x256xf32>
    %12 = arith.addf %9, %11 : vector<8x256xf32>
    %cst_12 = arith.constant 0.000000e+00 : f32
    %13 = vector.broadcast %cst_12 : f32 to vector<8x256xf32>
    %14 = arith.maximumf %12, %13 : vector<8x256xf32>
    %c0_13 = arith.constant 0 : index
    %c0_14 = arith.constant 0 : index
    %15 = vector.load %arg7[%c0_13, %c0_14] : memref<256x8xf32, #tpu.memory_space<vmem>>, vector<256x8xf32>
    %cst_15 = arith.constant dense<0.000000e+00> : vector<8x8xf32>
    %16 = tpu.matmul %14, %15, %cst_15 {dimension_numbers = #tpu.dot_dimension_numbers<[1], [0], [0], [1], [0, 0, 1, 1], [], []>} : vector<8x256xf32>, vector<256x8xf32>, vector<8x8xf32> -> vector<8x8xf32>
    %c0_16 = arith.constant 0 : index
    %c0_17 = arith.constant 0 : index
    %17 = vector.load %arg8[%c0_16, %c0_17] : memref<256x8xf32, #tpu.memory_space<vmem>>, vector<256x8xf32>
    %cst_18 = arith.constant dense<0.000000e+00> : vector<8x8xf32>
    %18 = tpu.matmul %7, %17, %cst_18 {dimension_numbers = #tpu.dot_dimension_numbers<[1], [0], [0], [1], [0, 0, 1, 1], [], []>} : vector<8x256xf32>, vector<256x8xf32>, vector<8x8xf32> -> vector<8x8xf32>
    %cst_19 = arith.constant 5.000000e-01 : f32
    %19 = vector.broadcast %cst_19 : f32 to vector<8x8xf32>
    %20 = arith.cmpf ogt, %4, %19 : vector<8x8xf32>
    %21 = math.exp %16 : vector<8x8xf32>
    %cst_20 = arith.constant 0.000000e+00 : f32
    %22 = vector.broadcast %cst_20 : f32 to vector<8x8xf32>
    %23 = arith.select %20, %22, %21 : vector<8x8xi1>, vector<8x8xf32>
    %cst_21 = arith.constant dense<0.000000e+00> : vector<8xf32>
    %24 = vector.multi_reduction <add>, %23, %cst_21 [1] : vector<8x8xf32> to vector<8xf32>
    %25 = vector.shape_cast %24 : vector<8xf32> to vector<8x1xf32>
    %26 = arith.mulf %23, %18 : vector<8x8xf32>
    %cst_22 = arith.constant dense<0.000000e+00> : vector<8xf32>
    %27 = vector.multi_reduction <add>, %26, %cst_22 [1] : vector<8x8xf32> to vector<8xf32>
    %28 = vector.shape_cast %27 : vector<8xf32> to vector<8x1xf32>
    %29 = math.rsqrt %25 : vector<8x1xf32>
    %30 = arith.mulf %28, %29 : vector<8x1xf32>
    %c0_23 = arith.constant 0 : index
    %c0_24 = arith.constant 0 : index
    %31 = vector.load %arg9[%c0_23, %c0_24] : memref<8x1xf32, #tpu.memory_space<vmem>>, vector<8x1xf32>
    tpu.vector_store %arg9[%c0_23, %c0_24], %30 {strides = array<i32>} : memref<8x1xf32, #tpu.memory_space<vmem>>, vector<8x1xf32>,
    return
  }
  func.func @transform_0(%arg0: i32) -> (i32, i32) {
    %c0_i32 = arith.constant 0 : i32
    %c0_i32_0 = arith.constant 0 : i32
    return %arg0, %c0_i32 : i32, i32
  }
  func.func @transform_1(%arg0: i32) -> (i32, i32) {
    %c0_i32 = arith.constant 0 : i32
    %c0_i32_0 = arith.constant 0 : i32
    return %arg0, %c0_i32 : i32, i32
  }
  func.func @transform_2(%arg0: i32) -> (i32, i32) {
    %c0_i32 = arith.constant 0 : i32
    %c0_i32_0 = arith.constant 0 : i32
    return %arg0, %c0_i32 : i32, i32
  }
  func.func @transform_3(%arg0: i32) -> (i32, i32) {
    %c0_i32 = arith.constant 0 : i32
    %c0_i32_0 = arith.constant 0 : i32
    %c0_i32_1 = arith.constant 0 : i32
    return %c0_i32, %c0_i32_0 : i32, i32
  }
  func.func @transform_4(%arg0: i32) -> (i32, i32) {
    %c0_i32 = arith.constant 0 : i32
    %c0_i32_0 = arith.constant 0 : i32
    %c0_i32_1 = arith.constant 0 : i32
    return %c0_i32, %c0_i32_0 : i32, i32
  }
  func.func @transform_5(%arg0: i32) -> (i32, i32) {
    %c0_i32 = arith.constant 0 : i32
    %c0_i32_0 = arith.constant 0 : i32
    %c0_i32_1 = arith.constant 0 : i32
    return %c0_i32, %c0_i32_0 : i32, i32
  }
  func.func @transform_6(%arg0: i32) -> (i32, i32) {
    %c0_i32 = arith.constant 0 : i32
    %c0_i32_0 = arith.constant 0 : i32
    %c0_i32_1 = arith.constant 0 : i32
    return %c0_i32, %c0_i32_0 : i32, i32
  }
  func.func @transform_7(%arg0: i32) -> (i32, i32) {
    %c0_i32 = arith.constant 0 : i32
    %c0_i32_0 = arith.constant 0 : i32
    %c0_i32_1 = arith.constant 0 : i32
    return %c0_i32, %c0_i32_0 : i32, i32
  }
  func.func @transform_8(%arg0: i32) -> (i32, i32) {
    %c0_i32 = arith.constant 0 : i32
    %c0_i32_0 = arith.constant 0 : i32
    return %arg0, %c0_i32 : i32, i32
  }
}

</mosaic_0001>

<llo_original>
// kernel: tpu_custom_call.1
$region0: #{tpu_custom_call.1}
  #allocation0 [shape = 'u32[]', space=smem, size = 0x4, offset = 0x4, fixed_abs, tag = 'smem constant byte address 0x4 - core index']
  #allocation1 [shape = 'u32[144,128]{1,0:T(1,128)}', space=vmem, size = 0x12000, scoped, tag = 'internal scratch']
  %s0 = inlined_call_operand.hbm [shape: bf16[16,32], index: 0, kind: input, shape index: {}]
  %s1 = inlined_call_operand.hbm [shape: bf16[16,256], index: 1, kind: input, shape index: {}]
  %s2 = inlined_call_operand.vmem [shape: f32[16,8], index: 2, kind: input, shape index: {}]
  %s3 = inlined_call_operand.vmem [shape: f32[32,256], index: 3, kind: input, shape index: {}]
  %s4 = inlined_call_operand.vmem [shape: f32[256,256], index: 4, kind: input, shape index: {}]
  %s5 = inlined_call_operand.vmem [shape: f32[1,256], index: 5, kind: input, shape index: {}]
  %s6 = inlined_call_operand.vmem [shape: f32[256,8], index: 6, kind: input, shape index: {}]
  %s7 = inlined_call_operand.vmem [shape: f32[256,8], index: 7, kind: input, shape index: {}]
  %s8 = inlined_call_operand.vmem [shape: f32[16,1], index: 8, kind: output, shape index: {}]
  %s9 = sld [smem:[#allocation0]]
  $region73: #{tpu_custom_call.1} parent=0
    _
  %s11 = ssub.s32 1, %s9
  %s12 = scalar_select 0, %s11, %s9
  $region1: #{tpu_custom_call.1} parent=0
    #allocation2 [shape = 'u8[4096]{0}', space=vmem, size = 0x1000, scoped, tag = 'input window, operand 0']
    #allocation3 [shape = 's32[2]{0}', space=sflag, size = 0x8, scoped, tag = 'scoped memory for tpu_custom_call.1']
    #allocation4 [shape = 'u8[8192]{0}', space=vmem, size = 0x2000, scoped, tag = 'input window, operand 1']
    #allocation5 [shape = 's32[2]{0}', space=sflag, size = 0x8, scoped, tag = 'scoped memory for tpu_custom_call.1']
    %13 = vsyncpa [#allocation3], 0
    %s14 = scalar_lea.sflag [#allocation3], 1
    %15 = vsyncpa %s14, 0
    %16 = vsyncpa [#allocation5], 0
    %s17 = scalar_lea.sflag [#allocation5], 1
    %18 = vsyncpa %s17, 0
    loop: start=0, step=1, limit=4
    $region2: #{tpu_custom_call.1} parent=1 // loop_pre_header
      _
    $region3: #{tpu_custom_call.1} parent=1 // loop_header
      %s20 = sphi 0, %s24
      %p21 = scmp.ge.s32.totalorder %s20, 4
      %s30 = sphi 0, %s32
      %s33 = sphi 0, %s30
      %s34 = sphi 0, %s33
      %s50 = sphi 0, %s34
      %s56 = sphi 0, %s58
      %s59 = sphi 0, %s56
      %s60 = sphi 0, %s59
      %s76 = sphi 0, %s60
      %s82 = sphi 0, %s84
      %s85 = sphi 0, %s82
      %s86 = sphi 0, %s85
      %s102 = sphi 0, %s86
      %s106 = sphi 0, %s106
      %s108 = sphi 0, %s106
      %s109 = sphi 0, %s108
      %s123 = sphi 0, %s109
      %s127 = sphi 0, %s127
      %s129 = sphi 0, %s127
      %s130 = sphi 0, %s129
      %s144 = sphi 0, %s130
      %s148 = sphi 0, %s148
      %s150 = sphi 0, %s148
      %s151 = sphi 0, %s150
      %s165 = sphi 0, %s151
      %s169 = sphi 0, %s169
      %s171 = sphi 0, %s169
      %s172 = sphi 0, %s171
      %s186 = sphi 0, %s172
      %s190 = sphi 0, %s190
      %s192 = sphi 0, %s190
      %s193 = sphi 0, %s192
      %s207 = sphi 0, %s193
      %s213 = sphi 0, %s215
      %s216 = sphi 0, %s213
      %s217 = sphi 0, %s216
      %s233 = sphi 0, %s217
    $region4: #{tpu_custom_call.1} parent=1 // loop_header_branch
      %23 = sbr.rel (%p21) target = $region8
    $region5: #{tpu_custom_call.1} parent=1 // loop_body
      %s25 = ssub.s32 %s20, 1
      %s26 = ssub.s32 %s20, 2
      %s27 = sadd.s32 %s20, 1
      %s28 = ssub.s32 %s20, %s27
      %p29 = scmp.eq.s32.totalorder %s28, 0
      %s31 = sadd.s32 %s30, 1
      %s32 = scalar_select %p29, %s30, %s31
      %p35 = pneg %p29
      %p36 = scmp.eq.s32.totalorder %s20, 1
      %p37 = por %p35, %p36
      %p38 = scmp.ne.s32.totalorder %s30, %s33
      %p39 = scmp.eq.s32.totalorder %s20, 0
      %p40 = por %p38, %p39
      %p41 = scmp.ne.s32.totalorder %s30, %s33
      %p42 = scmp.eq.s32.totalorder %s25, 1
      %p43 = por %p41, %p42
      %p44 = scmp.ne.s32.totalorder %s33, %s34
      %p45 = scmp.eq.s32.totalorder %s25, 0
      %p46 = por %p44, %p45
      %p47 = scmp.ne.s32.totalorder %s33, %s34
      %p48 = scmp.eq.s32.totalorder %s26, 1
      %p49 = por %p47, %p48
      %p51 = scmp.ne.s32.totalorder %s34, %s50
      %p52 = scmp.eq.s32.totalorder %s26, 0
      %p53 = por %p51, %p52
      %s54 = ssub.s32 %s20, %s27
      %p55 = scmp.eq.s32.totalorder %s54, 0
      %s57 = sadd.s32 %s56, 1
      %s58 = scalar_select %p55, %s56, %s57
      %p61 = pneg %p55
      %p62 = scmp.eq.s32.totalorder %s20, 1
      %p63 = por %p61, %p62
      %p64 = scmp.ne.s32.totalorder %s56, %s59
      %p65 = scmp.eq.s32.totalorder %s20, 0
      %p66 = por %p64, %p65
      %p67 = scmp.ne.s32.totalorder %s56, %s59
      %p68 = scmp.eq.s32.totalorder %s25, 1
      %p69 = por %p67, %p68
      %p70 = scmp.ne.s32.totalorder %s59, %s60
      %p71 = scmp.eq.s32.totalorder %s25, 0
      %p72 = por %p70, %p71
      %p73 = scmp.ne.s32.totalorder %s59, %s60
      %p74 = scmp.eq.s32.totalorder %s26, 1
      %p75 = por %p73, %p74
      %p77 = scmp.ne.s32.totalorder %s60, %s76
      %p78 = scmp.eq.s32.totalorder %s26, 0
      %p79 = por %p77, %p78
      %s80 = ssub.s32 %s20, %s27
      %p81 = scmp.eq.s32.totalorder %s80, 0
      %s83 = sadd.s32 %s82, 1
      %s84 = scalar_select %p81, %s82, %s83
      %p87 = pneg %p81
      %p88 = scmp.eq.s32.totalorder %s20, 1
      %p89 = por %p87, %p88
      %p90 = scmp.ne.s32.totalorder %s82, %s85
      %p91 = scmp.eq.s32.totalorder %s20, 0
      %p92 = por %p90, %p91
      %p93 = scmp.ne.s32.totalorder %s82, %s85
      %p94 = scmp.eq.s32.totalorder %s25, 1
      %p95 = por %p93, %p94
      %p96 = scmp.ne.s32.totalorder %s85, %s86
      %p97 = scmp.eq.s32.totalorder %s25, 0
      %p98 = por %p96, %p97
      %p99 = scmp.ne.s32.totalorder %s85, %s86
      %p100 = scmp.eq.s32.totalorder %s26, 1
      %p101 = por %p99, %p100
      %p103 = scmp.ne.s32.totalorder %s86, %s102
      %p104 = scmp.eq.s32.totalorder %s26, 0
      %p105 = por %p103, %p104
      %s107 = sadd.s32 %s106, 1
      %p110 = scmp.eq.s32.totalorder %s20, 1
      %p111 = scmp.ne.s32.totalorder %s106, %s108
      %p112 = scmp.eq.s32.totalorder %s20, 0
      %p113 = por %p111, %p112
      %p114 = scmp.ne.s32.totalorder %s106, %s108
      %p115 = scmp.eq.s32.totalorder %s25, 1
      %p116 = por %p114, %p115
      %p117 = scmp.ne.s32.totalorder %s108, %s109
      %p118 = scmp.eq.s32.totalorder %s25, 0
      %p119 = por %p117, %p118
      %p120 = scmp.ne.s32.totalorder %s108, %s109
      %p121 = scmp.eq.s32.totalorder %s26, 1
      %p122 = por %p120, %p121
      %p124 = scmp.ne.s32.totalorder %s109, %s123
      %p125 = scmp.eq.s32.totalorder %s26, 0
      %p126 = por %p124, %p125
      %s128 = sadd.s32 %s127, 1
      %p131 = scmp.eq.s32.totalorder %s20, 1
      %p132 = scmp.ne.s32.totalorder %s127, %s129
      %p133 = scmp.eq.s32.totalorder %s20, 0
      %p134 = por %p132, %p133
      %p135 = scmp.ne.s32.totalorder %s127, %s129
      %p136 = scmp.eq.s32.totalorder %s25, 1
      %p137 = por %p135, %p136
      %p138 = scmp.ne.s32.totalorder %s129, %s130
      %p139 = scmp.eq.s32.totalorder %s25, 0
      %p140 = por %p138, %p139
      %p141 = scmp.ne.s32.totalorder %s129, %s130
      %p142 = scmp.eq.s32.totalorder %s26, 1
      %p143 = por %p141, %p142
      %p145 = scmp.ne.s32.totalorder %s130, %s144
      %p146 = scmp.eq.s32.totalorder %s26, 0
      %p147 = por %p145, %p146
      %s149 = sadd.s32 %s148, 1
      %p152 = scmp.eq.s32.totalorder %s20, 1
      %p153 = scmp.ne.s32.totalorder %s148, %s150
      %p154 = scmp.eq.s32.totalorder %s20, 0
      %p155 = por %p153, %p154
      %p156 = scmp.ne.s32.totalorder %s148, %s150
      %p157 = scmp.eq.s32.totalorder %s25, 1
      %p158 = por %p156, %p157
      %p159 = scmp.ne.s32.totalorder %s150, %s151
      %p160 = scmp.eq.s32.totalorder %s25, 0
      %p161 = por %p159, %p160
      %p162 = scmp.ne.s32.totalorder %s150, %s151
      %p163 = scmp.eq.s32.totalorder %s26, 1
      %p164 = por %p162, %p163
      %p166 = scmp.ne.s32.totalorder %s151, %s165
      %p167 = scmp.eq.s32.totalorder %s26, 0
      %p168 = por %p166, %p167
      %s170 = sadd.s32 %s169, 1
      %p173 = scmp.eq.s32.totalorder %s20, 1
      %p174 = scmp.ne.s32.totalorder %s169, %s171
      %p175 = scmp.eq.s32.totalorder %s20, 0
      %p176 = por %p174, %p175
      %p177 = scmp.ne.s32.totalorder %s169, %s171
      %p178 = scmp.eq.s32.totalorder %s25, 1
      %p179 = por %p177, %p178
      %p180 = scmp.ne.s32.totalorder %s171, %s172
      %p181 = scmp.eq.s32.totalorder %s25, 0
      %p182 = por %p180, %p181
      %p183 = scmp.ne.s32.totalorder %s171, %s172
      %p184 = scmp.eq.s32.totalorder %s26, 1
      %p185 = por %p183, %p184
      %p187 = scmp.ne.s32.totalorder %s172, %s186
      %p188 = scmp.eq.s32.totalorder %s26, 0
      %p189 = por %p187, %p188
      %s191 = sadd.s32 %s190, 1
      %p194 = scmp.eq.s32.totalorder %s20, 1
      %p195 = scmp.ne.s32.totalorder %s190, %s192
      %p196 = scmp.eq.s32.totalorder %s20, 0
      %p197 = por %p195, %p196
      %p198 = scmp.ne.s32.totalorder %s190, %s192
      %p199 = scmp.eq.s32.totalorder %s25, 1
      %p200 = por %p198, %p199
      %p201 = scmp.ne.s32.totalorder %s192, %s193
      %p202 = scmp.eq.s32.totalorder %s25, 0
      %p203 = por %p201, %p202
      %p204 = scmp.ne.s32.totalorder %s192, %s193
      %p205 = scmp.eq.s32.totalorder %s26, 1
      %p206 = por %p204, %p205
      %p208 = scmp.ne.s32.totalorder %s193, %s207
      %p209 = scmp.eq.s32.totalorder %s26, 0
      %p210 = por %p208, %p209
      %s211 = ssub.s32 %s20, %s27
      %p212 = scmp.eq.s32.totalorder %s211, 0
      %s214 = sadd.s32 %s213, 1
      %s215 = scalar_select %p212, %s213, %s214
      %p218 = pneg %p212
      %p219 = scmp.eq.s32.totalorder %s20, 1
      %p220 = por %p218, %p219
      %p221 = scmp.ne.s32.totalorder %s213, %s216
      %p222 = scmp.eq.s32.totalorder %s20, 0
      %p223 = por %p221, %p222
      %p224 = scmp.ne.s32.totalorder %s213, %s216
      %p225 = scmp.eq.s32.totalorder %s25, 1
      %p226 = por %p224, %p225
      %p227 = scmp.ne.s32.totalorder %s216, %s217
      %p228 = scmp.eq.s32.totalorder %s25, 0
      %p229 = por %p227, %p228
      %p230 = scmp.ne.s32.totalorder %s216, %s217
      %p231 = scmp.eq.s32.totalorder %s26, 1
      %p232 = por %p230, %p231
      %p234 = scmp.ne.s32.totalorder %s217, %s233
      %p235 = scmp.eq.s32.totalorder %s26, 0
      %p236 = por %p234, %p235
      %p237 = scmp.le.s32.totalorder 1, %s20
      %p238 = scmp.lt.s32.totalorder %s20, 3
      %p239 = pnand %p237, %p238
      %p240 = pneg %p239
      // Predicated region
      $region9: #{tpu_custom_call.1} parent=5 // pred_check
        _
      $region10: #{tpu_custom_call.1} parent=5 // pred_check_branch
        %242 = sbr.rel (%p239) target = $region12
      $region11: #{tpu_custom_call.1} parent=5 // pred_region
        %s243 = ssub.s32 %s20, 1
        // Predicated region
        $region13: #{tpu_custom_call.1} parent=11 // pred_check
          %p244 = pneg %p119
        $region14: #{tpu_custom_call.1} parent=11 // pred_check_branch
          %246 = sbr.rel (%p244) target = $region16
        $region15: #{tpu_custom_call.1} parent=11 // pred_region
          _
        $region16: #{tpu_custom_call.1} parent=11 // pred_fallthru
          _
        // Predicated region
        $region17: #{tpu_custom_call.1} parent=11 // pred_check
          %p247 = pneg %p140
        $region18: #{tpu_custom_call.1} parent=11 // pred_check_branch
          %249 = sbr.rel (%p247) target = $region20
        $region19: #{tpu_custom_call.1} parent=11 // pred_region
          _
        $region20: #{tpu_custom_call.1} parent=11 // pred_fallthru
          _
        // Predicated region
        $region21: #{tpu_custom_call.1} parent=11 // pred_check
          %p250 = pneg %p161
        $region22: #{tpu_custom_call.1} parent=11 // pred_check_branch
          %252 = sbr.rel (%p250) target = $region24
        $region23: #{tpu_custom_call.1} parent=11 // pred_region
          _
        $region24: #{tpu_custom_call.1} parent=11 // pred_fallthru
          _
        // Predicated region
        $region25: #{tpu_custom_call.1} parent=11 // pred_check
          %p253 = pneg %p182
        $region26: #{tpu_custom_call.1} parent=11 // pred_check_branch
          %255 = sbr.rel (%p253) target = $region28
        $region27: #{tpu_custom_call.1} parent=11 // pred_region
          _
        $region28: #{tpu_custom_call.1} parent=11 // pred_fallthru
          _
        // Predicated region
        $region29: #{tpu_custom_call.1} parent=11 // pred_check
          %p256 = pneg %p203
        $region30: #{tpu_custom_call.1} parent=11 // pred_check_branch
          %258 = sbr.rel (%p256) target = $region32
        $region31: #{tpu_custom_call.1} parent=11 // pred_region
          _
        $region32: #{tpu_custom_call.1} parent=11 // pred_fallthru
          _
      $region12: #{tpu_custom_call.1} parent=5 // pred_fallthru
        _
      %p259 = scmp.lt.s32.totalorder %s20, 2
      // Predicated region
      $region33: #{tpu_custom_call.1} parent=5 // pred_check
        %p260 = pneg %p259
      $region34: #{tpu_custom_call.1} parent=5 // pred_check_branch
        %262 = sbr.rel (%p260) target = $region36
      $region35: #{tpu_custom_call.1} parent=5 // pred_region
        // Predicated region
        $region37: #{tpu_custom_call.1} parent=35 // pred_check
          %p263 = pneg %p40
        $region38: #{tpu_custom_call.1} parent=35 // pred_check_branch
          %265 = sbr.rel (%p263) target = $region40
        $region39: #{tpu_custom_call.1} parent=35 // pred_region
          %s266 = sand.u32 %s30, 1
          %s267 = scalar_lea.sflag [#allocation3], %s266
          %s268 = sand.u32 %s30, 1
          %s269 = smul.addr %s268, 4
          %s270 = scalar_lea.vmem [#allocation2], %s269
          %s272 = ssub.s32 64, 64
          %273 = vsyncadd %s267, %s272
          %s274 = smul.addr %s20, 64
          %s275 = scalar_lea.hbm %s0, %s274
          %s277 = sshll.u32 %s270, 4
          %s278 = int_to_ptr.vmem [resolvable:$true] %s277
          %280 = dma.hbm_to_vmem [thread:$0]  %s275, 64, %s278, %s267
        $region40: #{tpu_custom_call.1} parent=35 // pred_fallthru
          _
        // Predicated region
        $region41: #{tpu_custom_call.1} parent=35 // pred_check
          %p281 = pneg %p66
        $region42: #{tpu_custom_call.1} parent=35 // pred_check_branch
          %283 = sbr.rel (%p281) target = $region44
        $region43: #{tpu_custom_call.1} parent=35 // pred_region
          %s284 = sand.u32 %s56, 1
          %s285 = scalar_lea.sflag [#allocation5], %s284
          %s286 = sand.u32 %s56, 1
          %s287 = smul.addr %s286, 8
          %s288 = scalar_lea.vmem [#allocation4], %s287
          %s290 = ssub.s32 128, 128
          %291 = vsyncadd %s285, %s290
          %s292 = smul.addr %s20, 2
          %s293 = smul.addr %s292, 64
          %s294 = scalar_lea.hbm %s1, %s293
          %s296 = sshll.u32 %s288, 4
          %s297 = int_to_ptr.vmem [resolvable:$true] %s296
          %299 = dma.hbm_to_vmem [thread:$0]  %s294, 128, %s297, %s285
        $region44: #{tpu_custom_call.1} parent=35 // pred_fallthru
          _
        // Predicated region
        $region45: #{tpu_custom_call.1} parent=35 // pred_check
          %p300 = pneg %p92
        $region46: #{tpu_custom_call.1} parent=35 // pred_check_branch
          %302 = sbr.rel (%p300) target = $region48
        $region47: #{tpu_custom_call.1} parent=35 // pred_region
          %p303 = scmp.lt.s32.totalorder %s20, 1
          %s304 = scalar_select %p303, %s20, 1
          %s305 = smul.addr %s304, 8
          %s306 = scalar_lea.vmem %s2, %s305
        $region48: #{tpu_custom_call.1} parent=35 // pred_fallthru
          _
      $region36: #{tpu_custom_call.1} parent=5 // pred_fallthru
        _
      %p307 = scmp.le.s32.totalorder 1, %s20
      %p308 = scmp.lt.s32.totalorder %s20, 3
      %p309 = pnand %p307, %p308
      %p310 = pneg %p309
      // Predicated region
      $region49: #{tpu_custom_call.1} parent=5 // pred_check
        _
      $region50: #{tpu_custom_call.1} parent=5 // pred_check_branch
        %312 = sbr.rel (%p309) target = $region52
      $region51: #{tpu_custom_call.1} parent=5 // pred_region
        %s313 = ssub.s32 %s20, 1
        %s314 = sand.u32 %s33, 1
        %s315 = scalar_lea.sflag [#allocation3], %s314
        %s316 = sand.u32 %s33, 1
        %s317 = smul.addr %s316, 4
        %s318 = scalar_lea.vmem [#allocation2], %s317
        // Predicated region
        $region53: #{tpu_custom_call.1} parent=51 // pred_check
          %p319 = pneg %p46
        $region54: #{tpu_custom_call.1} parent=51 // pred_check_branch
          %321 = sbr.rel (%p319) target = $region56
        $region55: #{tpu_custom_call.1} parent=51 // pred_region
          %322 = dma.done %s315, 64
        $region56: #{tpu_custom_call.1} parent=51 // pred_fallthru
          _
        %s323 = sand.u32 %s59, 1
        %s324 = scalar_lea.sflag [#allocation5], %s323
        %s325 = sand.u32 %s59, 1
        %s326 = smul.addr %s325, 8
        %s327 = scalar_lea.vmem [#allocation4], %s326
        // Predicated region
        $region57: #{tpu_custom_call.1} parent=51 // pred_check
          %p328 = pneg %p72
        $region58: #{tpu_custom_call.1} parent=51 // pred_check_branch
          %330 = sbr.rel (%p328) target = $region60
        $region59: #{tpu_custom_call.1} parent=51 // pred_region
          %331 = dma.done %s324, 128
        $region60: #{tpu_custom_call.1} parent=51 // pred_fallthru
          _
        %s332 = sand.u32 %s33, 1
        %s333 = scalar_lea.sflag [#allocation3], %s332
        %s334 = sand.u32 %s33, 1
        %s335 = smul.addr %s334, 4
        %s336 = scalar_lea.vmem [#allocation2], %s335
        %p337 = pneg %p46
        %p338 = pneg %p43
        %s339 = sand.u32 %s59, 1
        %s340 = scalar_lea.sflag [#allocation5], %s339
        %s341 = sand.u32 %s59, 1
        %s342 = smul.addr %s341, 8
        %s343 = scalar_lea.vmem [#allocation4], %s342
        %p344 = pneg %p72
        %p345 = pneg %p69
        %p346 = scmp.lt.s32.totalorder %s25, 1
        %s347 = scalar_select %p346, %s25, 1
        %s348 = smul.addr %s347, 8
        %s349 = scalar_lea.vmem %s2, %s348
        %p350 = pneg %p98
        %p351 = pneg %p95
        %p352 = pneg %p119
        %p353 = pneg %p116
        %p354 = pneg %p140
        %p355 = pneg %p137
        %p356 = pneg %p161
        %p357 = pneg %p158
        %p358 = pneg %p182
        %p359 = pneg %p179
        %p360 = pneg %p203
        %p361 = pneg %p200
        %p362 = pneg %p229
        %p363 = pneg %p226
        %p364 = scmp.lt.s32.totalorder %s25, 1
        %s365 = scalar_select %p364, %s25, 1
        %s366 = smul.addr %s365, 8
        %s367 = scalar_lea.vmem %s8, %s366
        %p368 = scmp.lt.s32.totalorder %s25, 1
        %s369 = scalar_select %p368, %s25, 1
        %s370 = smul.addr %s369, 8
        %s371 = scalar_lea.vmem %s2, %s370
        %p372 = scmp.lt.s32.totalorder %s25, 1
        %s373 = scalar_select %p372, %s25, 1
        %s374 = smul.addr %s373, 8
        %s375 = scalar_lea.vmem %s8, %s374
        %v376 = vld [vmem:[%s318] sm:$0xf]
        %v377 = vunpack.c.l.bf16 %v376
        %v378 = vld [vmem:[%s327] sm:$0xff]
        %v379 = vunpack.c.l.bf16 %v378
        %v380 = vunpack.c.h.bf16 %v378
        %v381 = vld [vmem:[%s371] sm:$0xff]
        %v382 = vld [vmem:[%s3] sm:$0xff]
        %v383 = vld [vmem:[%s3 + $0x8] sm:$0xff]
        %v384 = vld [vmem:[%s3 + $0x10] sm:$0xff]
        %v385 = vld [vmem:[%s3 + $0x18] sm:$0xff]
        %v386 = vld [vmem:[%s3 + $0x20] sm:$0xff]
        %v387 = vld [vmem:[%s3 + $0x28] sm:$0xff]
        %v388 = vld [vmem:[%s3 + $0x30] sm:$0xff]
        %v389 = vld [vmem:[%s3 + $0x38] sm:$0xff]
        %vm390 = vcmask 261120
        %v392 = vsel %vm390, %v377, 0
        %394 = vmatprep.subr.mxu0 %v383
        %395 = vmatpush1.msra.mxu0 %v382
        %396 = vmatprep.subr.mxu0 %v385
        %397 = vmatpush1.msra.mxu0 %v384
        %398 = vmatprep.subr.mxu0 %v387
        %399 = vmatpush1.msra.mxu0 %v386
        %400 = vmatprep.subr.mxu0 %v389
        %401 = vmatpush1.msra.mxu0 %v388
        %402 = vmatprep.subr.mxu0 0.0
        %403 = vmatpush1.msra.mxu0 0.0
        %404 = vmatprep.subr.mxu0 0.0
        %405 = vmatpush1.msra.mxu0 0.0
        %406 = vmatprep.subr.mxu0 0.0
        %407 = vmatpush1.msra.mxu0 0.0
        %408 = vmatprep.subr.mxu0 0.0
        %409 = vmatpush1.msra.mxu0 0.0
        %410 = vmatprep.subr.mxu0 0.0
        %411 = vmatpush1.msra.mxu0 0.0
        %412 = vmatprep.subr.mxu0 0.0
        %413 = vmatpush1.msra.mxu0 0.0
        %414 = vmatprep.subr.mxu0 0.0
        %415 = vmatpush1.msra.mxu0 0.0
        %416 = vmatprep.subr.mxu0 0.0
        %417 = vmatpush1.msra.mxu0 0.0
        %418 = vmatprep.subr.mxu0 0.0
        %419 = vmatpush1.msra.mxu0 0.0
        %420 = vmatprep.subr.mxu0 0.0
        %421 = vmatpush1.msra.mxu0 0.0
        %422 = vmatprep.subr.mxu0 0.0
        %423 = vmatpush1.msra.mxu0 0.0
        %424 = vmatprep.subr.mxu0 0.0
        %425 = vmatpush1.msra.mxu0 0.0
        %426 = vmatprep.subr.mxu0 0.0
        %427 = vmatpush1.msra.mxu0 0.0
        %428 = vmatprep.subr.mxu0 0.0
        %429 = vmatpush1.msra.mxu0 0.0
        %430 = vmatprep.subr.mxu0 0.0
        %431 = vmatpush1.msra.mxu0 0.0
        %432 = vmatprep.subr.mxu0 0.0
        %433 = vmatpush1.msra.mxu0 0.0
        %434 = vmatprep.subr.mxu0 0.0
        %435 = vmatpush1.msra.mxu0 0.0
        %436 = vmatprep.subr.mxu0 0.0
        %437 = vmatpush1.msra.mxu0 0.0
        %438 = vmatprep.subr.mxu0 0.0
        %439 = vmatpush1.msra.mxu0 0.0
        %440 = vmatprep.subr.mxu0 0.0
        %441 = vmatpush1.msra.mxu0 0.0
        %442 = vmatprep.subr.mxu0 0.0
        %443 = vmatpush1.msra.mxu0 0.0
        %444 = vmatprep.subr.mxu0 0.0
        %445 = vmatpush1.msra.mxu0 0.0
        %446 = vmatprep.subr.mxu0 0.0
        %447 = vmatpush1.msra.mxu0 0.0
        %448 = vmatprep.subr.mxu0 0.0
        %449 = vmatpush1.msra.mxu0 0.0
        %450 = vmatprep.subr.mxu0 0.0
        %451 = vmatpush1.msra.mxu0 0.0
        %452 = vmatprep.subr.mxu0 0.0
        %453 = vmatpush1.msra.mxu0 0.0
        %454 = vmatprep.subr.mxu0 0.0
        %455 = vmatpush1.msra.mxu0 0.0
        %456 = vmatprep.subr.mxu0 0.0
        %457 = vmatpush1.msra.mxu0 0.0
        %458 = vmatprep.mubr.f32.mxu0 0.0
        %459 = vmatmul.mubr.f32.gmra.mrb[0].mxu0 %v392
        %v460 = vpop.f32.mrb[0].mxu0
        %v461 = vadd.f32 0.0, %v460
        %v462 = vpop.f32.mrb[0].mxu0
        %v463 = vadd.f32 0.0, %v462
        %464 = vdwg.mxu0
        %v465 = vmul.f32 %v379, %v461
        %v466 = vmul.f32 %v380, %v463
        %v467 = vld [vmem:[%s4] sm:$0xff]
        %v468 = vld [vmem:[%s4 + $0x8] sm:$0xff]
        %v469 = vld [vmem:[%s4 + $0x10] sm:$0xff]
        %v470 = vld [vmem:[%s4 + $0x18] sm:$0xff]
        %v471 = vld [vmem:[%s4 + $0x20] sm:$0xff]
        %v472 = vld [vmem:[%s4 + $0x28] sm:$0xff]
        %v473 = vld [vmem:[%s4 + $0x30] sm:$0xff]
        %v474 = vld [vmem:[%s4 + $0x38] sm:$0xff]
        %v475 = vld [vmem:[%s4 + $0x40] sm:$0xff]
        %v476 = vld [vmem:[%s4 + $0x48] sm:$0xff]
        %v477 = vld [vmem:[%s4 + $0x50] sm:$0xff]
        %v478 = vld [vmem:[%s4 + $0x58] sm:$0xff]
        %v479 = vld [vmem:[%s4 + $0x60] sm:$0xff]
        %v480 = vld [vmem:[%s4 + $0x68] sm:$0xff]
        %v481 = vld [vmem:[%s4 + $0x70] sm:$0xff]
        %v482 = vld [vmem:[%s4 + $0x78] sm:$0xff]
        %v483 = vld [vmem:[%s4 + $0x80] sm:$0xff]
        %v484 = vld [vmem:[%s4 + $0x88] sm:$0xff]
        %v485 = vld [vmem:[%s4 + $0x90] sm:$0xff]
        %v486 = vld [vmem:[%s4 + $0x98] sm:$0xff]
        %v487 = vld [vmem:[%s4 + $0xa0] sm:$0xff]
        %v488 = vld [vmem:[%s4 + $0xa8] sm:$0xff]
        %v489 = vld [vmem:[%s4 + $0xb0] sm:$0xff]
        %v490 = vld [vmem:[%s4 + $0xb8] sm:$0xff]
        %v491 = vld [vmem:[%s4 + $0xc0] sm:$0xff]
        %v492 = vld [vmem:[%s4 + $0xc8] sm:$0xff]
        %v493 = vld [vmem:[%s4 + $0xd0] sm:$0xff]
        %v494 = vld [vmem:[%s4 + $0xd8] sm:$0xff]
        %v495 = vld [vmem:[%s4 + $0xe0] sm:$0xff]
        %v496 = vld [vmem:[%s4 + $0xe8] sm:$0xff]
        %v497 = vld [vmem:[%s4 + $0xf0] sm:$0xff]
        %v498 = vld [vmem:[%s4 + $0xf8] sm:$0xff]
        %v499 = vld [vmem:[%s4 + $0x100] sm:$0xff]
        %v500 = vld [vmem:[%s4 + $0x108] sm:$0xff]
        %v501 = vld [vmem:[%s4 + $0x110] sm:$0xff]
        %v502 = vld [vmem:[%s4 + $0x118] sm:$0xff]
        %v503 = vld [vmem:[%s4 + $0x120] sm:$0xff]
        %v504 = vld [vmem:[%s4 + $0x128] sm:$0xff]
        %v505 = vld [vmem:[%s4 + $0x130] sm:$0xff]
        %v506 = vld [vmem:[%s4 + $0x138] sm:$0xff]
        %v507 = vld [vmem:[%s4 + $0x140] sm:$0xff]
        %v508 = vld [vmem:[%s4 + $0x148] sm:$0xff]
        %v509 = vld [vmem:[%s4 + $0x150] sm:$0xff]
        %v510 = vld [vmem:[%s4 + $0x158] sm:$0xff]
        %v511 = vld [vmem:[%s4 + $0x160] sm:$0xff]
        %v512 = vld [vmem:[%s4 + $0x168] sm:$0xff]
        %v513 = vld [vmem:[%s4 + $0x170] sm:$0xff]
        %v514 = vld [vmem:[%s4 + $0x178] sm:$0xff]
        %v515 = vld [vmem:[%s4 + $0x180] sm:$0xff]
        %v516 = vld [vmem:[%s4 + $0x188] sm:$0xff]
        %v517 = vld [vmem:[%s4 + $0x190] sm:$0xff]
        %v518 = vld [vmem:[%s4 + $0x198] sm:$0xff]
        %v519 = vld [vmem:[%s4 + $0x1a0] sm:$0xff]
        %v520 = vld [vmem:[%s4 + $0x1a8] sm:$0xff]
        %v521 = vld [vmem:[%s4 + $0x1b0] sm:$0xff]
        %v522 = vld [vmem:[%s4 + $0x1b8] sm:$0xff]
        %v523 = vld [vmem:[%s4 + $0x1c0] sm:$0xff]
        %v524 = vld [vmem:[%s4 + $0x1c8] sm:$0xff]
        %v525 = vld [vmem:[%s4 + $0x1d0] sm:$0xff]
        %v526 = vld [vmem:[%s4 + $0x1d8] sm:$0xff]
        %v527 = vld [vmem:[%s4 + $0x1e0] sm:$0xff]
        %v528 = vld [vmem:[%s4 + $0x1e8] sm:$0xff]
        %v529 = vld [vmem:[%s4 + $0x1f0] sm:$0xff]
        %v530 = vld [vmem:[%s4 + $0x1f8] sm:$0xff]
        %v531 = vld [vmem:[%s5] sm:$0x3]
        %v533 = vlaneseq
        %v534 = vshrl.u32 %v533, 7
        %v535 = vsub.s32 0, %v534
        %v536 = vrot.slane %v531, %v535
        %v537 = vlaneseq
        %v538 = vshrl.u32 %v537, 7
        %v539 = vsub.s32 1, %v538
        %v540 = vrot.slane %v531, %v539
        %543 = vmatprep.subr.mxu0 %v468
        %544 = vmatpush1.msra.mxu0 %v467
        %545 = vmatprep.subr.mxu0 %v470
        %546 = vmatpush1.msra.mxu0 %v469
        %547 = vmatprep.subr.mxu0 %v472
        %548 = vmatpush1.msra.mxu0 %v471
        %549 = vmatprep.subr.mxu0 %v474
        %550 = vmatpush1.msra.mxu0 %v473
        %551 = vmatprep.subr.mxu0 %v476
        %552 = vmatpush1.msra.mxu0 %v475
        %553 = vmatprep.subr.mxu0 %v478
        %554 = vmatpush1.msra.mxu0 %v477
        %555 = vmatprep.subr.mxu0 %v480
        %556 = vmatpush1.msra.mxu0 %v479
        %557 = vmatprep.subr.mxu0 %v482
        %558 = vmatpush1.msra.mxu0 %v481
        %559 = vmatprep.subr.mxu0 %v484
        %560 = vmatpush1.msra.mxu0 %v483
        %561 = vmatprep.subr.mxu0 %v486
        %562 = vmatpush1.msra.mxu0 %v485
        %563 = vmatprep.subr.mxu0 %v488
        %564 = vmatpush1.msra.mxu0 %v487
        %565 = vmatprep.subr.mxu0 %v490
        %566 = vmatpush1.msra.mxu0 %v489
        %567 = vmatprep.subr.mxu0 %v492
        %568 = vmatpush1.msra.mxu0 %v491
        %569 = vmatprep.subr.mxu0 %v494
        %570 = vmatpush1.msra.mxu0 %v493
        %571 = vmatprep.subr.mxu0 %v496
        %572 = vmatpush1.msra.mxu0 %v495
        %573 = vmatprep.subr.mxu0 %v498
        %574 = vmatpush1.msra.mxu0 %v497
        %575 = vmatprep.subr.mxu0 %v500
        %576 = vmatpush1.msra.mxu0 %v499
        %577 = vmatprep.subr.mxu0 %v502
        %578 = vmatpush1.msra.mxu0 %v501
        %579 = vmatprep.subr.mxu0 %v504
        %580 = vmatpush1.msra.mxu0 %v503
        %581 = vmatprep.subr.mxu0 %v506
        %582 = vmatpush1.msra.mxu0 %v505
        %583 = vmatprep.subr.mxu0 %v508
        %584 = vmatpush1.msra.mxu0 %v507
        %585 = vmatprep.subr.mxu0 %v510
        %586 = vmatpush1.msra.mxu0 %v509
        %587 = vmatprep.subr.mxu0 %v512
        %588 = vmatpush1.msra.mxu0 %v511
        %589 = vmatprep.subr.mxu0 %v514
        %590 = vmatpush1.msra.mxu0 %v513
        %591 = vmatprep.subr.mxu0 %v516
        %592 = vmatpush1.msra.mxu0 %v515
        %593 = vmatprep.subr.mxu0 %v518
        %594 = vmatpush1.msra.mxu0 %v517
        %595 = vmatprep.subr.mxu0 %v520
        %596 = vmatpush1.msra.mxu0 %v519
        %597 = vmatprep.subr.mxu0 %v522
        %598 = vmatpush1.msra.mxu0 %v521
        %599 = vmatprep.subr.mxu0 %v524
        %600 = vmatpush1.msra.mxu0 %v523
        %601 = vmatprep.subr.mxu0 %v526
        %602 = vmatpush1.msra.mxu0 %v525
        %603 = vmatprep.subr.mxu0 %v528
        %604 = vmatpush1.msra.mxu0 %v527
        %605 = vmatprep.subr.mxu0 %v530
        %606 = vmatpush1.msra.mxu0 %v529
        %607 = vmatprep.mubr.f32.mxu0 %v466
        %608 = vmatmul.mubr.f32.gmra.mrb[0].mxu0 %v465
        %v609 = vpop.f32.mrb[0].mxu0
        %v610 = vadd.f32 %v536, %v609
        %v611 = vpop.f32.mrb[0].mxu0
        %v612 = vadd.f32 %v540, %v611
        %613 = vdwg.mxu0
        %v614 = vmax.f32 %v610, 0.0
        %v615 = vmax.f32 %v612, 0.0
        %v616 = vld [vmem:[%s6] sm:$0xff]
        %v617 = vld [vmem:[%s6 + $0x8] sm:$0xff]
        %v618 = vld [vmem:[%s6 + $0x10] sm:$0xff]
        %v619 = vld [vmem:[%s6 + $0x18] sm:$0xff]
        %v620 = vld [vmem:[%s6 + $0x20] sm:$0xff]
        %v621 = vld [vmem:[%s6 + $0x28] sm:$0xff]
        %v622 = vld [vmem:[%s6 + $0x30] sm:$0xff]
        %v623 = vld [vmem:[%s6 + $0x38] sm:$0xff]
        %v624 = vld [vmem:[%s6 + $0x40] sm:$0xff]
        %v625 = vld [vmem:[%s6 + $0x48] sm:$0xff]
        %v626 = vld [vmem:[%s6 + $0x50] sm:$0xff]
        %v627 = vld [vmem:[%s6 + $0x58] sm:$0xff]
        %v628 = vld [vmem:[%s6 + $0x60] sm:$0xff]
        %v629 = vld [vmem:[%s6 + $0x68] sm:$0xff]
        %v630 = vld [vmem:[%s6 + $0x70] sm:$0xff]
        %v631 = vld [vmem:[%s6 + $0x78] sm:$0xff]
        %v632 = vld [vmem:[%s6 + $0x80] sm:$0xff]
        %v633 = vld [vmem:[%s6 + $0x88] sm:$0xff]
        %v634 = vld [vmem:[%s6 + $0x90] sm:$0xff]
        %v635 = vld [vmem:[%s6 + $0x98] sm:$0xff]
        %v636 = vld [vmem:[%s6 + $0xa0] sm:$0xff]
        %v637 = vld [vmem:[%s6 + $0xa8] sm:$0xff]
        %v638 = vld [vmem:[%s6 + $0xb0] sm:$0xff]
        %v639 = vld [vmem:[%s6 + $0xb8] sm:$0xff]
        %v640 = vld [vmem:[%s6 + $0xc0] sm:$0xff]
        %v641 = vld [vmem:[%s6 + $0xc8] sm:$0xff]
        %v642 = vld [vmem:[%s6 + $0xd0] sm:$0xff]
        %v643 = vld [vmem:[%s6 + $0xd8] sm:$0xff]
        %v644 = vld [vmem:[%s6 + $0xe0] sm:$0xff]
        %v645 = vld [vmem:[%s6 + $0xe8] sm:$0xff]
        %v646 = vld [vmem:[%s6 + $0xf0] sm:$0xff]
        %v647 = vld [vmem:[%s6 + $0xf8] sm:$0xff]
        %648 = vmatprep.subr.mxu0 0.0
        %649 = vmatpush1.msra.mxu0 %v616
        %650 = vmatprep.subr.mxu0 0.0
        %651 = vmatpush1.msra.mxu0 %v617
        %652 = vmatprep.subr.mxu0 0.0
        %653 = vmatpush1.msra.mxu0 %v618
        %654 = vmatprep.subr.mxu0 0.0
        %655 = vmatpush1.msra.mxu0 %v619
        %656 = vmatprep.subr.mxu0 0.0
        %657 = vmatpush1.msra.mxu0 %v620
        %658 = vmatprep.subr.mxu0 0.0
        %659 = vmatpush1.msra.mxu0 %v621
        %660 = vmatprep.subr.mxu0 0.0
        %661 = vmatpush1.msra.mxu0 %v622
        %662 = vmatprep.subr.mxu0 0.0
        %663 = vmatpush1.msra.mxu0 %v623
        %664 = vmatprep.subr.mxu0 0.0
        %665 = vmatpush1.msra.mxu0 %v624
        %666 = vmatprep.subr.mxu0 0.0
        %667 = vmatpush1.msra.mxu0 %v625
        %668 = vmatprep.subr.mxu0 0.0
        %669 = vmatpush1.msra.mxu0 %v626
        %670 = vmatprep.subr.mxu0 0.0
        %671 = vmatpush1.msra.mxu0 %v627
        %672 = vmatprep.subr.mxu0 0.0
        %673 = vmatpush1.msra.mxu0 %v628
        %674 = vmatprep.subr.mxu0 0.0
        %675 = vmatpush1.msra.mxu0 %v629
        %676 = vmatprep.subr.mxu0 0.0
        %677 = vmatpush1.msra.mxu0 %v630
        %678 = vmatprep.subr.mxu0 0.0
        %679 = vmatpush1.msra.mxu0 %v631
        %680 = vmatprep.subr.mxu0 0.0
        %681 = vmatpush1.msra.mxu0 %v632
        %682 = vmatprep.subr.mxu0 0.0
        %683 = vmatpush1.msra.mxu0 %v633
        %684 = vmatprep.subr.mxu0 0.0
        %685 = vmatpush1.msra.mxu0 %v634
        %686 = vmatprep.subr.mxu0 0.0
        %687 = vmatpush1.msra.mxu0 %v635
        %688 = vmatprep.subr.mxu0 0.0
        %689 = vmatpush1.msra.mxu0 %v636
        %690 = vmatprep.subr.mxu0 0.0
        %691 = vmatpush1.msra.mxu0 %v637
        %692 = vmatprep.subr.mxu0 0.0
        %693 = vmatpush1.msra.mxu0 %v638
        %694 = vmatprep.subr.mxu0 0.0
        %695 = vmatpush1.msra.mxu0 %v639
        %696 = vmatprep.subr.mxu0 0.0
        %697 = vmatpush1.msra.mxu0 %v640
        %698 = vmatprep.subr.mxu0 0.0
        %699 = vmatpush1.msra.mxu0 %v641
        %700 = vmatprep.subr.mxu0 0.0
        %701 = vmatpush1.msra.mxu0 %v642
        %702 = vmatprep.subr.mxu0 0.0
        %703 = vmatpush1.msra.mxu0 %v643
        %704 = vmatprep.subr.mxu0 0.0
        %705 = vmatpush1.msra.mxu0 %v644
        %706 = vmatprep.subr.mxu0 0.0
        %707 = vmatpush1.msra.mxu0 %v645
        %708 = vmatprep.subr.mxu0 0.0
        %709 = vmatpush1.msra.mxu0 %v646
        %710 = vmatprep.subr.mxu0 0.0
        %711 = vmatpush1.msra.mxu0 %v647
        %712 = vmatprep.mubr.f32.mxu0 %v615
        %713 = vmatmul.mubr.f32.gmra.mrb[0].mxu0 %v614
        %v714 = vpop.f32.mrb[0].mxu0
        %v715 = vadd.f32 0.0, %v714
        %v716 = vpop.f32.mrb[0].mxu0
        %717 = vdwg.mxu0
        %v718 = vld [vmem:[%s7] sm:$0xff]
        %v719 = vld [vmem:[%s7 + $0x8] sm:$0xff]
        %v720 = vld [vmem:[%s7 + $0x10] sm:$0xff]
        %v721 = vld [vmem:[%s7 + $0x18] sm:$0xff]
        %v722 = vld [vmem:[%s7 + $0x20] sm:$0xff]
        %v723 = vld [vmem:[%s7 + $0x28] sm:$0xff]
        %v724 = vld [vmem:[%s7 + $0x30] sm:$0xff]
        %v725 = vld [vmem:[%s7 + $0x38] sm:$0xff]
        %v726 = vld [vmem:[%s7 + $0x40] sm:$0xff]
        %v727 = vld [vmem:[%s7 + $0x48] sm:$0xff]
        %v728 = vld [vmem:[%s7 + $0x50] sm:$0xff]
        %v729 = vld [vmem:[%s7 + $0x58] sm:$0xff]
        %v730 = vld [vmem:[%s7 + $0x60] sm:$0xff]
        %v731 = vld [vmem:[%s7 + $0x68] sm:$0xff]
        %v732 = vld [vmem:[%s7 + $0x70] sm:$0xff]
        %v733 = vld [vmem:[%s7 + $0x78] sm:$0xff]
        %v734 = vld [vmem:[%s7 + $0x80] sm:$0xff]
        %v735 = vld [vmem:[%s7 + $0x88] sm:$0xff]
        %v736 = vld [vmem:[%s7 + $0x90] sm:$0xff]
        %v737 = vld [vmem:[%s7 + $0x98] sm:$0xff]
        %v738 = vld [vmem:[%s7 + $0xa0] sm:$0xff]
        %v739 = vld [vmem:[%s7 + $0xa8] sm:$0xff]
        %v740 = vld [vmem:[%s7 + $0xb0] sm:$0xff]
        %v741 = vld [vmem:[%s7 + $0xb8] sm:$0xff]
        %v742 = vld [vmem:[%s7 + $0xc0] sm:$0xff]
        %v743 = vld [vmem:[%s7 + $0xc8] sm:$0xff]
        %v744 = vld [vmem:[%s7 + $0xd0] sm:$0xff]
        %v745 = vld [vmem:[%s7 + $0xd8] sm:$0xff]
        %v746 = vld [vmem:[%s7 + $0xe0] sm:$0xff]
        %v747 = vld [vmem:[%s7 + $0xe8] sm:$0xff]
        %v748 = vld [vmem:[%s7 + $0xf0] sm:$0xff]
        %v749 = vld [vmem:[%s7 + $0xf8] sm:$0xff]
        %750 = vmatprep.subr.mxu0 0.0
        %751 = vmatpush1.msra.mxu0 %v718
        %752 = vmatprep.subr.mxu0 0.0
        %753 = vmatpush1.msra.mxu0 %v719
        %754 = vmatprep.subr.mxu0 0.0
        %755 = vmatpush1.msra.mxu0 %v720
        %756 = vmatprep.subr.mxu0 0.0
        %757 = vmatpush1.msra.mxu0 %v721
        %758 = vmatprep.subr.mxu0 0.0
        %759 = vmatpush1.msra.mxu0 %v722
        %760 = vmatprep.subr.mxu0 0.0
        %761 = vmatpush1.msra.mxu0 %v723
        %762 = vmatprep.subr.mxu0 0.0
        %763 = vmatpush1.msra.mxu0 %v724
        %764 = vmatprep.subr.mxu0 0.0
        %765 = vmatpush1.msra.mxu0 %v725
        %766 = vmatprep.subr.mxu0 0.0
        %767 = vmatpush1.msra.mxu0 %v726
        %768 = vmatprep.subr.mxu0 0.0
        %769 = vmatpush1.msra.mxu0 %v727
        %770 = vmatprep.subr.mxu0 0.0
        %771 = vmatpush1.msra.mxu0 %v728
        %772 = vmatprep.subr.mxu0 0.0
        %773 = vmatpush1.msra.mxu0 %v729
        %774 = vmatprep.subr.mxu0 0.0
        %775 = vmatpush1.msra.mxu0 %v730
        %776 = vmatprep.subr.mxu0 0.0
        %777 = vmatpush1.msra.mxu0 %v731
        %778 = vmatprep.subr.mxu0 0.0
        %779 = vmatpush1.msra.mxu0 %v732
        %780 = vmatprep.subr.mxu0 0.0
        %781 = vmatpush1.msra.mxu0 %v733
        %782 = vmatprep.subr.mxu0 0.0
        %783 = vmatpush1.msra.mxu0 %v734
        %784 = vmatprep.subr.mxu0 0.0
        %785 = vmatpush1.msra.mxu0 %v735
        %786 = vmatprep.subr.mxu0 0.0
        %787 = vmatpush1.msra.mxu0 %v736
        %788 = vmatprep.subr.mxu0 0.0
        %789 = vmatpush1.msra.mxu0 %v737
        %790 = vmatprep.subr.mxu0 0.0
        %791 = vmatpush1.msra.mxu0 %v738
        %792 = vmatprep.subr.mxu0 0.0
        %793 = vmatpush1.msra.mxu0 %v739
        %794 = vmatprep.subr.mxu0 0.0
        %795 = vmatpush1.msra.mxu0 %v740
        %796 = vmatprep.subr.mxu0 0.0
        %797 = vmatpush1.msra.mxu0 %v741
        %798 = vmatprep.subr.mxu0 0.0
        %799 = vmatpush1.msra.mxu0 %v742
        %800 = vmatprep.subr.mxu0 0.0
        %801 = vmatpush1.msra.mxu0 %v743
        %802 = vmatprep.subr.mxu0 0.0
        %803 = vmatpush1.msra.mxu0 %v744
        %804 = vmatprep.subr.mxu0 0.0
        %805 = vmatpush1.msra.mxu0 %v745
        %806 = vmatprep.subr.mxu0 0.0
        %807 = vmatpush1.msra.mxu0 %v746
        %808 = vmatprep.subr.mxu0 0.0
        %809 = vmatpush1.msra.mxu0 %v747
        %810 = vmatprep.subr.mxu0 0.0
        %811 = vmatpush1.msra.mxu0 %v748
        %812 = vmatprep.subr.mxu0 0.0
        %813 = vmatpush1.msra.mxu0 %v749
        %814 = vmatprep.mubr.f32.mxu0 %v466
        %815 = vmatmul.mubr.f32.gmra.mrb[0].mxu0 %v465
        %v816 = vpop.f32.mrb[0].mxu0
        %v817 = vadd.f32 0.0, %v816
        %v818 = vpop.f32.mrb[0].mxu0
        %819 = vdwg.mxu0
        %vm820 = vcmp.gt.f32.partialorder %v381, 0.5
        %v821 = vmul.f32 %v715, 1.442695
        %v822 = vpow.pop %v821
        %v823 = vsel %vm820, 0.0, %v822
        %vm824 = vcmask 64512
        %v825 = vsel %vm824, %v823, 0.0
        %826 = vadd.xlane.f32.xlu0 %v825
        %v827 = vpop.xlane.xlu0 %826
        %v828 = vmul.f32 %v823, %v817
        %v829 = vsel %vm824, %v828, 0.0
        %830 = vadd.xlane.f32.xlu0 %v829
        %v831 = vpop.xlane.xlu0 %830
        %v832 = vrsqrt.pop %v827
        %v833 = vmul.f32 %v831, %v832
        %vm834 = vcmask 7168
        %835 = vst.msk [vmem:[%s375] sm:$0xff] %vm834, %v833
        %p836 = scmp.lt.s32.totalorder %s25, 1
        %s837 = scalar_select %p836, %s25, 1
        %s838 = smul.addr %s837, 8
        %s839 = scalar_lea.vmem %s8, %s838
        // Predicated region
        $region61: #{tpu_custom_call.1} parent=51 // pred_check
          %p840 = pneg %p226
        $region62: #{tpu_custom_call.1} parent=51 // pred_check_branch
          %842 = sbr.rel (%p840) target = $region64
        $region63: #{tpu_custom_call.1} parent=51 // pred_region
          _
        $region64: #{tpu_custom_call.1} parent=51 // pred_fallthru
          _
      $region52: #{tpu_custom_call.1} parent=5 // pred_fallthru
        _
      %p843 = scmp.le.s32.totalorder 2, %s20
      // Predicated region
      $region65: #{tpu_custom_call.1} parent=5 // pred_check
        %p844 = pneg %p843
      $region66: #{tpu_custom_call.1} parent=5 // pred_check_branch
        %846 = sbr.rel (%p844) target = $region68
      $region67: #{tpu_custom_call.1} parent=5 // pred_region
        %s847 = ssub.s32 %s20, 2
        // Predicated region
        $region69: #{tpu_custom_call.1} parent=67 // pred_check
          %p848 = pneg %p232
        $region70: #{tpu_custom_call.1} parent=67 // pred_check_branch
          %850 = sbr.rel (%p848) target = $region72
        $region71: #{tpu_custom_call.1} parent=67 // pred_region
          %p851 = scmp.lt.s32.totalorder %s26, 1
          %s852 = scalar_select %p851, %s26, 1
          %s853 = smul.addr %s852, 8
          %s854 = scalar_lea.vmem %s8, %s853
        $region72: #{tpu_custom_call.1} parent=67 // pred_fallthru
          _
      $region68: #{tpu_custom_call.1} parent=5 // pred_fallthru
        _
    $region6: #{tpu_custom_call.1} parent=1 // loop_footer
      %s24 = sadd.s32 1, %s20
    $region7: #{tpu_custom_call.1} parent=1 // loop_footer_branch
      %19 = sbr.rel target = $region3
    $region8: #{tpu_custom_call.1} parent=1 // loop_exit
      _
    %855 = vsyncpa [#allocation3], 1
    %s856 = scalar_lea.sflag [#allocation3], 1
    %857 = vsyncpa %s856, 1
    %858 = vsyncpa [#allocation5], 1
    %s859 = scalar_lea.sflag [#allocation5], 1
    %860 = vsyncpa %s859, 1

</llo_original>
